<compile_context>
chip_gen: v6e
topology: v6e:2x2x1
jax: 0.10.0
libtpu: 0.0.40
codegen_flags: <defaults>
</compile_context>

<pallas_src>
import functools

import jax
import jax.numpy as jnp
from jax.experimental import pallas as pl
from jax.experimental.pallas import tpu as pltpu

LANE = 128  # TPU lane width


def _vmem():
    # Whole (tiny) array resident in VMEM, no tiling.
    return pl.BlockSpec(memory_space=pltpu.MemorySpace.VMEM)


# ----------------------------------------------------------------------------
# Fused kernel: GRU cell + critic head + Gaussian mean head + log-prob
# ----------------------------------------------------------------------------
def policy_act_kernel(x_ref, h_ref, wih_ref, whh_ref, bih_ref, bhh_ref,
                      wheads_ref, bheads_ref, std_ref,
                      h_out_ref, packed_ref,
                      *, hidden, num_outputs, mean_lo, mean_hi, std_eps):
    x = x_ref[...]                          # [B, I]
    h = h_ref[...]                          # [B, H]

    # --- GRU cell (RNNStateEncoder). Gate blocks are padded to 128 lanes each
    #     host-side, so the per-gate slices below are vreg-aligned (free).
    gi = jnp.dot(x, wih_ref[...], preferred_element_type=jnp.float32) + bih_ref[...]
    gh = jnp.dot(h, whh_ref[...], preferred_element_type=jnp.float32) + bhh_ref[...]

    i_r = gi[:, 0 * LANE:1 * LANE]
    i_z = gi[:, 1 * LANE:2 * LANE]
    i_n = gi[:, 2 * LANE:3 * LANE]
    h_r = gh[:, 0 * LANE:1 * LANE]
    h_z = gh[:, 1 * LANE:2 * LANE]
    h_n = gh[:, 2 * LANE:3 * LANE]

    r = jax.nn.sigmoid(i_r + h_r)
    z = jax.nn.sigmoid(i_z + h_z)
    n = jnp.tanh(i_n + r * h_n)

    z_h = z[:, :hidden]                     # offset-0 slices: no lane rotation
    n_h = n[:, :hidden]
    h_new = (1.0 - z_h) * n_h + z_h * h     # [B, H]
    h_out_ref[...] = h_new

    # --- Heads. features.view(-1, B*H) @ W is computed WITHOUT the flatten:
    #     out[c] = sum_{b,h} h_new[b,h] * w_heads[c,b,h]
    #     (c = 0 -> critic, c = 1..A -> Gaussian mean). VPU mul + XLU reduces.
    lane = jax.lax.broadcasted_iota(jnp.int32, (1, LANE), 1)
    raw = bheads_ref[...]                   # [1, 128], biases at lanes 0..A
    for c in range(1 + num_outputs):        # tiny static unroll (1 + A)
        prod = h_new * wheads_ref[c]                       # [B, H]
        s = jnp.sum(prod, axis=1, keepdims=True)           # [B, 1]  (lane reduce)
        t = jnp.sum(s, axis=0, keepdims=True)              # [1, 1]  (sublane reduce)
        raw = raw + jnp.where(lane == c, t, 0.0)

    # Gaussian mean: sigmoid squashed into [mean_lo, mean_hi]
    squashed = mean_lo + (mean_hi - mean_lo) * jax.nn.sigmoid(raw)

    # deterministic=True -> action = mode = mean, so the quadratic term of the
    # diag-Gaussian log-prob is exactly 0; only the std-dependent constant remains.
    std = jax.nn.softplus(std_ref[...]) + std_eps           # [1, A]
    logp = (-jnp.sum(jnp.log(std), axis=-1, keepdims=True)
            - 0.5 * num_outputs * jnp.log(2.0 * jnp.pi))    # [1, 1]

    # Pack value / action / log-prob into one lane-dense [1,128] output:
    #   lane 0          -> value
    #   lanes 1..A      -> action (mode == mean)
    #   lane A+1        -> action_log_probs
    packed = jnp.where((lane >= 1) & (lane <= num_outputs), squashed, 0.0)
    packed = jnp.where(lane == 0, raw, packed)
    packed = jnp.where(lane == num_outputs + 1, logp, packed)
    packed_ref[...] = packed


# ----------------------------------------------------------------------------
# Wrapper (single pallas_call; tiny slices of the packed output in plain JAX)
# ----------------------------------------------------------------------------
@functools.partial(jax.jit, static_argnames=("mean_lo", "mean_hi", "std_eps"))
def policy_act(observations, rnn_hidden_states, kparams,
               mean_lo=0.0, mean_hi=1.0, std_eps=1e-3):
    B, _ = observations.shape
    H = kparams["w_hh_p"].shape[0]
    A = kparams["std_param"].shape[1]

    h_in = rnn_hidden_states.reshape(B, H)

    kernel = functools.partial(
        policy_act_kernel, hidden=H, num_outputs=A,
        mean_lo=float(mean_lo), mean_hi=float(mean_hi), std_eps=float(std_eps))

    h_new, packed = pl.pallas_call(
        kernel,
        out_shape=(jax.ShapeDtypeStruct((B, H), jnp.float32),      # new hidden
                   jax.ShapeDtypeStruct((1, LANE), jnp.float32)),  # packed heads
        in_specs=[_vmem()] * 9,
        out_specs=(_vmem(), _vmem()),
        input_output_aliases={1: 0},   # reuse the hidden-state HBM buffer
    )(observations, h_in,
      kparams["w_ih_p"], kparams["w_hh_p"], kparams["b_ih_p"], kparams["b_hh_p"],
      kparams["w_heads_p"], kparams["b_heads_p"], kparams["std_param"])

    value = packed[:, 0:1]
    action = packed[:, 1:1 + A]
    action_log_probs = packed[:, 1 + A:2 + A]
    new_hidden = h_new.reshape(1, B, H)
    return value, action, action_log_probs, new_hidden


# ----------------------------------------------------------------------------
# Parameters: natural (PyTorch-like) layout + one-time packing for the kernel
# ----------------------------------------------------------------------------
def init_params(key, batch_size, input_size, hidden_size, output_size):
    ks = jax.random.split(key, 4)
    feat = batch_size * hidden_size
    scale = 0.1
    return {
        # GRU (RNNStateEncoder), gate order (r, z, n), x @ W layout
        "w_ih": scale * jax.random.normal(ks[0], (input_size, 3 * hidden_size), jnp.float32),
        "w_hh": scale * jax.random.normal(ks[1], (hidden_size, 3 * hidden_size), jnp.float32),
        "b_ih": jnp.zeros((1, 3 * hidden_size), jnp.float32),
        "b_hh": jnp.zeros((1, 3 * hidden_size), jnp.float32),
        # CriticHead: Linear(batch_size*hidden_size, 1), bias = 0
        "w_critic": scale * jax.random.normal(ks[2], (feat, 1), jnp.float32),
        "b_critic": jnp.zeros((1, 1), jnp.float32),
        # Gaussian head: Linear(batch_size*hidden_size, output_size) + std param
        "w_mean": scale * jax.random.normal(ks[3], (feat, output_size), jnp.float32),
        "b_mean": jnp.zeros((1, output_size), jnp.float32),
        "std_param": jnp.zeros((1, output_size), jnp.float32),
    }


def pack_params(p, batch_size, hidden_size, output_size):
    """One-time host-side repack of natural params into the kernel layout."""
    B, H, A = batch_size, hidden_size, output_size

    def pad_gates(w):  # [rows, 3H] -> [rows, 3*LANE], gate g at lanes [g*LANE, g*LANE+H)
        rows = w.shape[0]
        out = jnp.zeros((rows, 3 * LANE), jnp.float32)
        for g in range(3):
            out = out.at[:, g * LANE:g * LANE + H].set(w[:, g * H:(g + 1) * H])
        return out

    # heads weight: [1+A, B, H]; channel 0 = critic, channels 1..A = mean
    w_heads = jnp.zeros((1 + A, B, H), jnp.float32)
    w_heads = w_heads.at[0].set(p["w_critic"][:, 0].reshape(B, H))
    w_heads = w_heads.at[1:1 + A].set(
        jnp.transpose(p["w_mean"].reshape(B, H, A), (2, 0, 1)))

    # heads bias packed into the [1, 128] output layout (lane 0 critic, 1..A mean)
    b_heads = jnp.zeros((1, LANE), jnp.float32)
    b_heads = b_heads.at[:, 0:1].set(p["b_critic"])
    b_heads = b_heads.at[:, 1:1 + A].set(p["b_mean"])

    return {
        "w_ih_p": pad_gates(p["w_ih"]),
        "w_hh_p": pad_gates(p["w_hh"]),
        "b_ih_p": pad_gates(p["b_ih"]),
        "b_hh_p": pad_gates(p["b_hh"]),
        "w_heads_p": w_heads,
        "b_heads_p": b_heads,
        "std_param": p["std_param"],
    }


# ----------------------------------------------------------------------------
# Plain-JAX reference (natural params) for correctness checking
# ----------------------------------------------------------------------------
def policy_act_reference(obs, rnn_hidden, p, mean_lo=0.0, mean_hi=1.0, std_eps=1e-3):
    B, _ = obs.shape
    H = p["w_hh"].shape[0]
    hp = jax.lax.Precision.HIGHEST
    h = rnn_hidden.reshape(B, H)
    gi = jnp.dot(obs, p["w_ih"], precision=hp) + p["b_ih"]
    gh = jnp.dot(h, p["w_hh"], precision=hp) + p["b_hh"]
    i_r, i_z, i_n = gi[:, :H], gi[:, H:2 * H], gi[:, 2 * H:]
    h_r, h_z, h_n = gh[:, :H], gh[:, H:2 * H], gh[:, 2 * H:]
    r = jax.nn.sigmoid(i_r + h_r)
    z = jax.nn.sigmoid(i_z + h_z)
    n = jnp.tanh(i_n + r * h_n)
    h_new = (1.0 - z) * n + z * h
    f = h_new.reshape(1, -1)
    value = jnp.dot(f, p["w_critic"], precision=hp) + p["b_critic"]
    raw_mean = jnp.dot(f, p["w_mean"], precision=hp) + p["b_mean"]
    mean = mean_lo + (mean_hi - mean_lo) * jax.nn.sigmoid(raw_mean)
    std = jax.nn.softplus(p["std_param"]) + std_eps
    action = mean
    logp = jnp.sum(-0.5 * ((action - mean) / std) ** 2 - jnp.log(std)
                   - 0.5 * jnp.log(2.0 * jnp.pi), axis=-1, keepdims=True)
    return value, action, logp, h_new.reshape(1, B, H)


if __name__ == "__main__":
    # Shapes consistent with Policy(batch_size, input_size, hidden_size, output_size)
    B, I, H, A = 8, 16, 32, 4

    key = jax.random.PRNGKey(0)
    k_obs, k_hid, k_params = jax.random.split(key, 3)

    observations = jax.random.normal(k_obs, (B, I), jnp.float32)
    rnn_hidden_states = 0.1 * jax.random.normal(k_hid, (1, B, H), jnp.float32)
    params = init_params(k_params, B, I, H, A)
    kparams = pack_params(params, B, H, A)

    value, action, action_log_probs, new_hidden = policy_act(
        observations, rnn_hidden_states, kparams,
        mean_lo=0.0, mean_hi=1.0, std_eps=1e-3)
    jax.block_until_ready((value, action, action_log_probs, new_hidden))

    assert value.shape == (1, 1)
    assert action.shape == (1, A)
    assert action_log_probs.shape == (1, 1)
    assert new_hidden.shape == (1, B, H)

    # Correctness vs. plain-JAX reference
    rv, ra, rl, rh = policy_act_reference(observations, rnn_hidden_states, params,
                                          mean_lo=0.0, mean_hi=1.0, std_eps=1e-3)
    assert jnp.allclose(value, rv, atol=1e-3, rtol=1e-3)
    assert jnp.allclose(action, ra, atol=1e-3, rtol=1e-3)
    assert jnp.allclose(action_log_probs, rl, atol=1e-3, rtol=1e-3)
    assert jnp.allclose(new_hidden, rh, atol=1e-3, rtol=1e-3)

    # TODO(synk): stochastic (deterministic=False) sampling path of Policy.act is
    # not implemented in the kernel; only the deterministic/mode branch is.
    print("KERNEL_OK")
</pallas_src>

<mosaic_0001>
module attributes {stable_mosaic.version = 11 : i64} {
  func.func @policy_act_kernel(%arg0: memref<8x16xf32, #tpu.memory_space<vmem>>, %arg1: memref<8x32xf32, #tpu.memory_space<vmem>>, %arg2: memref<16x384xf32, #tpu.memory_space<vmem>>, %arg3: memref<32x384xf32, #tpu.memory_space<vmem>>, %arg4: memref<1x384xf32, #tpu.memory_space<vmem>>, %arg5: memref<1x384xf32, #tpu.memory_space<vmem>>, %arg6: memref<5x8x32xf32, #tpu.memory_space<vmem>>, %arg7: memref<1x128xf32, #tpu.memory_space<vmem>>, %arg8: memref<1x4xf32, #tpu.memory_space<vmem>>, %arg9: memref<8x32xf32, #tpu.memory_space<vmem>>, %arg10: memref<1x128xf32, #tpu.memory_space<vmem>>) attributes {dimension_semantics = [], scalar_prefetch = 0 : i64, scratch_operands = 0 : i64, tpu.core_type = #tpu.core_type<tc>} {
    %c0 = arith.constant 0 : index
    %c0_0 = arith.constant 0 : index
    %0 = vector.load %arg0[%c0, %c0_0] : memref<8x16xf32, #tpu.memory_space<vmem>>, vector<8x16xf32>
    %c0_1 = arith.constant 0 : index
    %c0_2 = arith.constant 0 : index
    %1 = vector.load %arg1[%c0_1, %c0_2] : memref<8x32xf32, #tpu.memory_space<vmem>>, vector<8x32xf32>
    %c0_3 = arith.constant 0 : index
    %c0_4 = arith.constant 0 : index
    %2 = vector.load %arg2[%c0_3, %c0_4] : memref<16x384xf32, #tpu.memory_space<vmem>>, vector<16x384xf32>
    %cst = arith.constant dense<0.000000e+00> : vector<8x384xf32>
    %3 = tpu.matmul %0, %2, %cst {dimension_numbers = #tpu.dot_dimension_numbers<[1], [0], [0], [1], [0, 0, 1, 1], [], []>} : vector<8x16xf32>, vector<16x384xf32>, vector<8x384xf32> -> vector<8x384xf32>
    %c0_5 = arith.constant 0 : index
    %c0_6 = arith.constant 0 : index
    %4 = vector.load %arg4[%c0_5, %c0_6] : memref<1x384xf32, #tpu.memory_space<vmem>>, vector<1x384xf32>
    %5 = vector.broadcast %4 : vector<1x384xf32> to vector<8x384xf32>
    %6 = arith.addf %3, %5 : vector<8x384xf32>
    %c0_7 = arith.constant 0 : index
    %c0_8 = arith.constant 0 : index
    %7 = vector.load %arg3[%c0_7, %c0_8] : memref<32x384xf32, #tpu.memory_space<vmem>>, vector<32x384xf32>
    %cst_9 = arith.constant dense<0.000000e+00> : vector<8x384xf32>
    %8 = tpu.matmul %1, %7, %cst_9 {dimension_numbers = #tpu.dot_dimension_numbers<[1], [0], [0], [1], [0, 0, 1, 1], [], []>} : vector<8x32xf32>, vector<32x384xf32>, vector<8x384xf32> -> vector<8x384xf32>
    %c0_10 = arith.constant 0 : index
    %c0_11 = arith.constant 0 : index
    %9 = vector.load %arg5[%c0_10, %c0_11] : memref<1x384xf32, #tpu.memory_space<vmem>>, vector<1x384xf32>
    %10 = vector.broadcast %9 : vector<1x384xf32> to vector<8x384xf32>
    %11 = arith.addf %8, %10 : vector<8x384xf32>
    %12 = vector.extract_strided_slice %6 {offsets = [0, 0], sizes = [8, 128], strides = [1, 1]} : vector<8x384xf32> to vector<8x128xf32>
    %13 = vector.extract_strided_slice %6 {offsets = [0, 128], sizes = [8, 128], strides = [1, 1]} : vector<8x384xf32> to vector<8x128xf32>
    %14 = vector.extract_strided_slice %6 {offsets = [0, 256], sizes = [8, 128], strides = [1, 1]} : vector<8x384xf32> to vector<8x128xf32>
    %15 = vector.extract_strided_slice %11 {offsets = [0, 0], sizes = [8, 128], strides = [1, 1]} : vector<8x384xf32> to vector<8x128xf32>
    %16 = vector.extract_strided_slice %11 {offsets = [0, 128], sizes = [8, 128], strides = [1, 1]} : vector<8x384xf32> to vector<8x128xf32>
    %17 = vector.extract_strided_slice %11 {offsets = [0, 256], sizes = [8, 128], strides = [1, 1]} : vector<8x384xf32> to vector<8x128xf32>
    %18 = arith.addf %12, %15 : vector<8x128xf32>
    %19 = arith.negf %18 : vector<8x128xf32>
    %20 = math.exp %19 : vector<8x128xf32>
    %cst_12 = arith.constant 1.000000e+00 : f32
    %21 = vector.broadcast %cst_12 : f32 to vector<8x128xf32>
    %22 = arith.addf %21, %20 : vector<8x128xf32>
    %23 = arith.divf %21, %22 : vector<8x128xf32>
    %24 = arith.addf %13, %16 : vector<8x128xf32>
    %25 = arith.negf %24 : vector<8x128xf32>
    %26 = math.exp %25 : vector<8x128xf32>
    %cst_13 = arith.constant 1.000000e+00 : f32
    %27 = vector.broadcast %cst_13 : f32 to vector<8x128xf32>
    %28 = arith.addf %27, %26 : vector<8x128xf32>
    %29 = arith.divf %27, %28 : vector<8x128xf32>
    %30 = arith.mulf %23, %17 : vector<8x128xf32>
    %31 = arith.addf %14, %30 : vector<8x128xf32>
    %32 = math.tanh %31 : vector<8x128xf32>
    %33 = vector.extract_strided_slice %29 {offsets = [0, 0], sizes = [8, 32], strides = [1, 1]} : vector<8x128xf32> to vector<8x32xf32>
    %34 = vector.extract_strided_slice %32 {offsets = [0, 0], sizes = [8, 32], strides = [1, 1]} : vector<8x128xf32> to vector<8x32xf32>
    %cst_14 = arith.constant 1.000000e+00 : f32
    %35 = vector.broadcast %cst_14 : f32 to vector<8x32xf32>
    %36 = arith.subf %35, %33 : vector<8x32xf32>
    %37 = arith.mulf %36, %34 : vector<8x32xf32>
    %38 = arith.mulf %33, %1 : vector<8x32xf32>
    %39 = arith.addf %37, %38 : vector<8x32xf32>
    %c0_15 = arith.constant 0 : index
    %c0_16 = arith.constant 0 : index
    %40 = vector.load %arg9[%c0_15, %c0_16] : memref<8x32xf32, #tpu.memory_space<vmem>>, vector<8x32xf32>
    tpu.vector_store %arg9[%c0_15, %c0_16], %39 {strides = array<i32>} : memref<8x32xf32, #tpu.memory_space<vmem>>, vector<8x32xf32>,
    %41 = tpu.iota {dimensions = array<i32: 1>} : vector<1x128xi32>
    %c0_17 = arith.constant 0 : index
    %c0_18 = arith.constant 0 : index
    %42 = vector.load %arg7[%c0_17, %c0_18] : memref<1x128xf32, #tpu.memory_space<vmem>>, vector<1x128xf32>
    %c0_19 = arith.constant 0 : index
    %c0_20 = arith.constant 0 : index
    %c0_21 = arith.constant 0 : index
    %43 = vector.load %arg6[%c0_19, %c0_20, %c0_21] : memref<5x8x32xf32, #tpu.memory_space<vmem>>, vector<1x8x32xf32>
    %44 = vector.shape_cast %43 : vector<1x8x32xf32> to vector<8x32xf32>
    %45 = arith.mulf %39, %44 : vector<8x32xf32>
    %cst_22 = arith.constant dense<0.000000e+00> : vector<8xf32>
    %46 = vector.multi_reduction <add>, %45, %cst_22 [1] : vector<8x32xf32> to vector<8xf32>
    %47 = vector.shape_cast %46 : vector<8xf32> to vector<8x1xf32>
    %cst_23 = arith.constant dense<0.000000e+00> : vector<1xf32>
    %48 = vector.multi_reduction <add>, %47, %cst_23 [0] : vector<8x1xf32> to vector<1xf32>
    %49 = vector.shape_cast %48 : vector<1xf32> to vector<1x1xf32>
    %c0_i32 = arith.constant 0 : i32
    %50 = vector.broadcast %c0_i32 : i32 to vector<1x128xi32>
    %51 = arith.cmpi eq, %41, %50 : vector<1x128xi32>
    %cst_24 = arith.constant 0.000000e+00 : f32
    %52 = vector.shape_cast %49 : vector<1x1xf32> to vector<1x1xf32>
    %53 = vector.broadcast %52 : vector<1x1xf32> to vector<1x128xf32>
    %54 = vector.broadcast %cst_24 : f32 to vector<1x128xf32>
    %55 = arith.select %51, %53, %54 : vector<1x128xi1>, vector<1x128xf32>
    %56 = arith.addf %42, %55 : vector<1x128xf32>
    %c1 = arith.constant 1 : index
    %c0_25 = arith.constant 0 : index
    %c0_26 = arith.constant 0 : index
    %57 = vector.load %arg6[%c1, %c0_25, %c0_26] : memref<5x8x32xf32, #tpu.memory_space<vmem>>, vector<1x8x32xf32>
    %58 = vector.shape_cast %57 : vector<1x8x32xf32> to vector<8x32xf32>
    %59 = arith.mulf %39, %58 : vector<8x32xf32>
    %cst_27 = arith.constant dense<0.000000e+00> : vector<8xf32>
    %60 = vector.multi_reduction <add>, %59, %cst_27 [1] : vector<8x32xf32> to vector<8xf32>
    %61 = vector.shape_cast %60 : vector<8xf32> to vector<8x1xf32>
    %cst_28 = arith.constant dense<0.000000e+00> : vector<1xf32>
    %62 = vector.multi_reduction <add>, %61, %cst_28 [0] : vector<8x1xf32> to vector<1xf32>
    %63 = vector.shape_cast %62 : vector<1xf32> to vector<1x1xf32>
    %c1_i32 = arith.constant 1 : i32
    %64 = vector.broadcast %c1_i32 : i32 to vector<1x128xi32>
    %65 = arith.cmpi eq, %41, %64 : vector<1x128xi32>
    %cst_29 = arith.constant 0.000000e+00 : f32
    %66 = vector.shape_cast %63 : vector<1x1xf32> to vector<1x1xf32>
    %67 = vector.broadcast %66 : vector<1x1xf32> to vector<1x128xf32>
    %68 = vector.broadcast %cst_29 : f32 to vector<1x128xf32>
    %69 = arith.select %65, %67, %68 : vector<1x128xi1>, vector<1x128xf32>
    %70 = arith.addf %56, %69 : vector<1x128xf32>
    %c2 = arith.constant 2 : index
    %c0_30 = arith.constant 0 : index
    %c0_31 = arith.constant 0 : index
    %71 = vector.load %arg6[%c2, %c0_30, %c0_31] : memref<5x8x32xf32, #tpu.memory_space<vmem>>, vector<1x8x32xf32>
    %72 = vector.shape_cast %71 : vector<1x8x32xf32> to vector<8x32xf32>
    %73 = arith.mulf %39, %72 : vector<8x32xf32>
    %cst_32 = arith.constant dense<0.000000e+00> : vector<8xf32>
    %74 = vector.multi_reduction <add>, %73, %cst_32 [1] : vector<8x32xf32> to vector<8xf32>
    %75 = vector.shape_cast %74 : vector<8xf32> to vector<8x1xf32>
    %cst_33 = arith.constant dense<0.000000e+00> : vector<1xf32>
    %76 = vector.multi_reduction <add>, %75, %cst_33 [0] : vector<8x1xf32> to vector<1xf32>
    %77 = vector.shape_cast %76 : vector<1xf32> to vector<1x1xf32>
    %c2_i32 = arith.constant 2 : i32
    %78 = vector.broadcast %c2_i32 : i32 to vector<1x128xi32>
    %79 = arith.cmpi eq, %41, %78 : vector<1x128xi32>
    %cst_34 = arith.constant 0.000000e+00 : f32
    %80 = vector.shape_cast %77 : vector<1x1xf32> to vector<1x1xf32>
    %81 = vector.broadcast %80 : vector<1x1xf32> to vector<1x128xf32>
    %82 = vector.broadcast %cst_34 : f32 to vector<1x128xf32>
    %83 = arith.select %79, %81, %82 : vector<1x128xi1>, vector<1x128xf32>
    %84 = arith.addf %70, %83 : vector<1x128xf32>
    %c3 = arith.constant 3 : index
    %c0_35 = arith.constant 0 : index
    %c0_36 = arith.constant 0 : index
    %85 = vector.load %arg6[%c3, %c0_35, %c0_36] : memref<5x8x32xf32, #tpu.memory_space<vmem>>, vector<1x8x32xf32>
    %86 = vector.shape_cast %85 : vector<1x8x32xf32> to vector<8x32xf32>
    %87 = arith.mulf %39, %86 : vector<8x32xf32>
    %cst_37 = arith.constant dense<0.000000e+00> : vector<8xf32>
    %88 = vector.multi_reduction <add>, %87, %cst_37 [1] : vector<8x32xf32> to vector<8xf32>
    %89 = vector.shape_cast %88 : vector<8xf32> to vector<8x1xf32>
    %cst_38 = arith.constant dense<0.000000e+00> : vector<1xf32>
    %90 = vector.multi_reduction <add>, %89, %cst_38 [0] : vector<8x1xf32> to vector<1xf32>
    %91 = vector.shape_cast %90 : vector<1xf32> to vector<1x1xf32>
    %c3_i32 = arith.constant 3 : i32
    %92 = vector.broadcast %c3_i32 : i32 to vector<1x128xi32>
    %93 = arith.cmpi eq, %41, %92 : vector<1x128xi32>
    %cst_39 = arith.constant 0.000000e+00 : f32
    %94 = vector.shape_cast %91 : vector<1x1xf32> to vector<1x1xf32>
    %95 = vector.broadcast %94 : vector<1x1xf32> to vector<1x128xf32>
    %96 = vector.broadcast %cst_39 : f32 to vector<1x128xf32>
    %97 = arith.select %93, %95, %96 : vector<1x128xi1>, vector<1x128xf32>
    %98 = arith.addf %84, %97 : vector<1x128xf32>
    %c4 = arith.constant 4 : index
    %c0_40 = arith.constant 0 : index
    %c0_41 = arith.constant 0 : index
    %99 = vector.load %arg6[%c4, %c0_40, %c0_41] : memref<5x8x32xf32, #tpu.memory_space<vmem>>, vector<1x8x32xf32>
    %100 = vector.shape_cast %99 : vector<1x8x32xf32> to vector<8x32xf32>
    %101 = arith.mulf %39, %100 : vector<8x32xf32>
    %cst_42 = arith.constant dense<0.000000e+00> : vector<8xf32>
    %102 = vector.multi_reduction <add>, %101, %cst_42 [1] : vector<8x32xf32> to vector<8xf32>
    %103 = vector.shape_cast %102 : vector<8xf32> to vector<8x1xf32>
    %cst_43 = arith.constant dense<0.000000e+00> : vector<1xf32>
    %104 = vector.multi_reduction <add>, %103, %cst_43 [0] : vector<8x1xf32> to vector<1xf32>
    %105 = vector.shape_cast %104 : vector<1xf32> to vector<1x1xf32>
    %c4_i32 = arith.constant 4 : i32
    %106 = vector.broadcast %c4_i32 : i32 to vector<1x128xi32>
    %107 = arith.cmpi eq, %41, %106 : vector<1x128xi32>
    %cst_44 = arith.constant 0.000000e+00 : f32
    %108 = vector.shape_cast %105 : vector<1x1xf32> to vector<1x1xf32>
    %109 = vector.broadcast %108 : vector<1x1xf32> to vector<1x128xf32>
    %110 = vector.broadcast %cst_44 : f32 to vector<1x128xf32>
    %111 = arith.select %107, %109, %110 : vector<1x128xi1>, vector<1x128xf32>
    %112 = arith.addf %98, %111 : vector<1x128xf32>
    %113 = arith.negf %112 : vector<1x128xf32>
    %114 = math.exp %113 : vector<1x128xf32>
    %cst_45 = arith.constant 1.000000e+00 : f32
    %115 = vector.broadcast %cst_45 : f32 to vector<1x128xf32>
    %116 = arith.addf %115, %114 : vector<1x128xf32>
    %117 = arith.divf %115, %116 : vector<1x128xf32>
    %cst_46 = arith.constant 1.000000e+00 : f32
    %118 = vector.broadcast %cst_46 : f32 to vector<1x128xf32>
    %119 = arith.mulf %118, %117 : vector<1x128xf32>
    %cst_47 = arith.constant 0.000000e+00 : f32
    %120 = vector.broadcast %cst_47 : f32 to vector<1x128xf32>
    %121 = arith.addf %120, %119 : vector<1x128xf32>
    %c0_48 = arith.constant 0 : index
    %c0_49 = arith.constant 0 : index
    %122 = vector.load %arg8[%c0_48, %c0_49] : memref<1x4xf32, #tpu.memory_space<vmem>>, vector<1x4xf32>
    %cst_50 = arith.constant 0.000000e+00 : f32
    %123 = vector.broadcast %cst_50 : f32 to vector<1x4xf32>
    %124 = arith.maximumf %122, %123 : vector<1x4xf32>
    %125 = vector.broadcast %cst_50 : f32 to vector<1x4xf32>
    %126 = arith.subf %122, %125 : vector<1x4xf32>
    %127 = arith.cmpf one, %126, %126 : vector<1x4xf32>
    %128 = vector.broadcast %cst_50 : f32 to vector<1x4xf32>
    %129 = arith.addf %122, %128 : vector<1x4xf32>
    %130 = math.absf %126 : vector<1x4xf32>
    %cst_51 = arith.constant 0.000000e+00 : f32
    %131 = vector.broadcast %cst_51 : f32 to vector<1x4xf32>
    %132 = arith.subf %131, %130 : vector<1x4xf32>
    %133 = math.exp %132 : vector<1x4xf32>
    %134 = math.log1p %133 : vector<1x4xf32>
    %135 = arith.addf %124, %134 : vector<1x4xf32>
    %136 = arith.select %127, %129, %135 : vector<1x4xi1>, vector<1x4xf32>
    %cst_52 = arith.constant 1.000000e-03 : f32
    %137 = vector.broadcast %cst_52 : f32 to vector<1x4xf32>
    %138 = arith.addf %136, %137 : vector<1x4xf32>
    %139 = math.log %138 : vector<1x4xf32>
    %cst_53 = arith.constant dense<0.000000e+00> : vector<1xf32>
    %140 = vector.multi_reduction <add>, %139, %cst_53 [1] : vector<1x4xf32> to vector<1xf32>
    %141 = vector.shape_cast %140 : vector<1xf32> to vector<1x1xf32>
    %cst_54 = arith.constant 0.000000e+00 : f32
    %142 = vector.broadcast %cst_54 : f32 to vector<1x1xf32>
    %143 = arith.subf %142, %141 : vector<1x1xf32>
    %cst_55 = arith.constant 6.28318548 : f32
    %144 = math.log %cst_55 : f32
    %cst_56 = arith.constant 2.000000e+00 : f32
    %145 = arith.mulf %cst_56, %144 : f32
    %146 = vector.broadcast %145 : f32 to vector<1x1xf32>
    %147 = arith.subf %143, %146 : vector<1x1xf32>
    %c1_i32_57 = arith.constant 1 : i32
    %148 = vector.broadcast %c1_i32_57 : i32 to vector<1x128xi32>
    %149 = arith.cmpi sge, %41, %148 : vector<1x128xi32>
    %c4_i32_58 = arith.constant 4 : i32
    %150 = vector.broadcast %c4_i32_58 : i32 to vector<1x128xi32>
    %151 = arith.cmpi sle, %41, %150 : vector<1x128xi32>
    %152 = arith.andi %149, %151 : vector<1x128xi1>
    %cst_59 = arith.constant 0.000000e+00 : f32
    %153 = vector.broadcast %cst_59 : f32 to vector<1x128xf32>
    %154 = arith.select %152, %121, %153 : vector<1x128xi1>, vector<1x128xf32>
    %c0_i32_60 = arith.constant 0 : i32
    %155 = vector.broadcast %c0_i32_60 : i32 to vector<1x128xi32>
    %156 = arith.cmpi eq, %41, %155 : vector<1x128xi32>
    %157 = arith.select %156, %112, %154 : vector<1x128xi1>, vector<1x128xf32>
    %c5_i32 = arith.constant 5 : i32
    %158 = vector.broadcast %c5_i32 : i32 to vector<1x128xi32>
    %159 = arith.cmpi eq, %41, %158 : vector<1x128xi32>
    %160 = vector.shape_cast %147 : vector<1x1xf32> to vector<1x1xf32>
    %161 = vector.broadcast %160 : vector<1x1xf32> to vector<1x128xf32>
    %162 = arith.select %159, %161, %157 : vector<1x128xi1>, vector<1x128xf32>
    %c0_61 = arith.constant 0 : index
    %c0_62 = arith.constant 0 : index
    %163 = vector.load %arg10[%c0_61, %c0_62] : memref<1x128xf32, #tpu.memory_space<vmem>>, vector<1x128xf32>
    tpu.vector_store %arg10[%c0_61, %c0_62], %162 {strides = array<i32>} : memref<1x128xf32, #tpu.memory_space<vmem>>, vector<1x128xf32>,
    return
  }
}

</mosaic_0001>

<llo_original>
// kernel: policy_act.1
$region0: #{policy_act.1}
  #allocation0 [shape = 'u32[]', space=smem, size = 0x4, offset = 0x4, fixed_abs, tag = 'smem constant byte address 0x4 - core index']
  #allocation1 [shape = 'u32[144,128]{1,0:T(1,128)}', space=vmem, size = 0x12000, scoped, tag = 'internal scratch']
  %s0 = inlined_call_operand.vmem [shape: f32[8,16], index: 0, kind: input, shape index: {}]
  %s1 = inlined_call_operand.vmem [shape: f32[8,32], index: 1, kind: input, shape index: {}, may-alias: {1,9}]
  %s2 = inlined_call_operand.hbm [shape: f32[16,384], index: 2, kind: input, shape index: {}]
  %s3 = inlined_call_operand.hbm [shape: f32[32,384], index: 3, kind: input, shape index: {}]
  %s4 = inlined_call_operand.vmem [shape: f32[1,384], index: 4, kind: input, shape index: {}]
  %s5 = inlined_call_operand.vmem [shape: f32[1,384], index: 5, kind: input, shape index: {}]
  %s6 = inlined_call_operand.hbm [shape: f32[5,8,32], index: 6, kind: input, shape index: {}]
  %s7 = inlined_call_operand.vmem [shape: f32[1,128], index: 7, kind: input, shape index: {}]
  %s8 = inlined_call_operand.hbm [shape: f32[1,4], index: 8, kind: input, shape index: {}]
  %s9 = inlined_call_operand.vmem [shape: f32[8,32], index: 9, kind: output, shape index: {0}, may-alias: {1,9}]
  %s10 = inlined_call_operand.vmem [shape: f32[1,128], index: 10, kind: output, shape index: {1}]
  %11 = xla_tuple %s9, %s10
  %s12 = sld [smem:[#allocation0]]
  $region70: #{policy_act.1} parent=0
    _
  %s14 = ssub.s32 1, %s12
  %s15 = scalar_select 0, %s14, %s12
  $region1: #{policy_act.1} parent=0
    #allocation2 [shape = 'u8[24576]{0}', space=vmem, size = 0x6000, scoped, tag = 'input window, operand 2, single buffered']
    #allocation3 [shape = 's32[1]{0}', space=sflag, size = 0x4, scoped, tag = 'scoped memory for policy_act.1']
    #allocation4 [shape = 'u8[49152]{0}', space=vmem, size = 0xc000, scoped, tag = 'input window, operand 3, single buffered']
    #allocation5 [shape = 's32[1]{0}', space=sflag, size = 0x4, scoped, tag = 'scoped memory for policy_act.1']
    #allocation6 [shape = 'u8[20480]{0}', space=vmem, size = 0x5000, scoped, tag = 'input window, operand 6, single buffered']
    #allocation7 [shape = 'u8[512]{0}', space=vmem, size = 0x400, scoped, tag = 'input window, operand 8, single buffered']
    #allocation8 [shape = 's32[1]{0}', space=sflag, size = 0x4, scoped, tag = 'scoped memory for policy_act.1']
    %16 = vsyncpa [#allocation3], 0
    %17 = vsyncpa [#allocation5], 0
    %18 = vsyncpa [#allocation8], 0
    // Predicated region
    $region2: #{policy_act.1} parent=1 // pred_check
      _
    $region3: #{policy_act.1} parent=1 // pred_check_branch
      %20 = sbr.rel (0) target = $region5
    $region4: #{policy_act.1} parent=1 // pred_region
      _
    $region5: #{policy_act.1} parent=1 // pred_fallthru
      _
    // Predicated region
    $region6: #{policy_act.1} parent=1 // pred_check
      _
    $region7: #{policy_act.1} parent=1 // pred_check_branch
      %22 = sbr.rel (0) target = $region9
    $region8: #{policy_act.1} parent=1 // pred_region
      _
    $region9: #{policy_act.1} parent=1 // pred_fallthru
      _
    // Predicated region
    $region10: #{policy_act.1} parent=1 // pred_check
      _
    $region11: #{policy_act.1} parent=1 // pred_check_branch
      %24 = sbr.rel (0) target = $region13
    $region12: #{policy_act.1} parent=1 // pred_region
      %s26 = ssub.s32 768, 768
      %27 = vsyncadd [#allocation3], %s26
      %s28 = sshll.u32 [#allocation2], 4
      %s29 = int_to_ptr.vmem [resolvable:$true] %s28
      %34 = dma.hbm_to_vmem [thread:$0]  %s2, 768, %s29, [#allocation3], 384, 384, 24
    $region13: #{policy_act.1} parent=1 // pred_fallthru
      _
    // Predicated region
    $region14: #{policy_act.1} parent=1 // pred_check
      _
    $region15: #{policy_act.1} parent=1 // pred_check_branch
      %36 = sbr.rel (0) target = $region17
    $region16: #{policy_act.1} parent=1 // pred_region
      %s38 = ssub.s32 1536, 1536
      %39 = vsyncadd [#allocation5], %s38
      %s40 = sshll.u32 [#allocation4], 4
      %s41 = int_to_ptr.vmem [resolvable:$true] %s40
      %46 = dma.hbm_to_vmem [thread:$0]  %s3, 1536, %s41, [#allocation5], 384, 384, 24
    $region17: #{policy_act.1} parent=1 // pred_fallthru
      _
    // Predicated region
    $region18: #{policy_act.1} parent=1 // pred_check
      _
    $region19: #{policy_act.1} parent=1 // pred_check_branch
      %48 = sbr.rel (0) target = $region21
    $region20: #{policy_act.1} parent=1 // pred_region
      _
    $region21: #{policy_act.1} parent=1 // pred_fallthru
      _
    // Predicated region
    $region22: #{policy_act.1} parent=1 // pred_check
      _
    $region23: #{policy_act.1} parent=1 // pred_check_branch
      %50 = sbr.rel (0) target = $region25
    $region24: #{policy_act.1} parent=1 // pred_region
      _
    $region25: #{policy_act.1} parent=1 // pred_fallthru
      _
    // Predicated region
    $region26: #{policy_act.1} parent=1 // pred_check
      _
    $region27: #{policy_act.1} parent=1 // pred_check_branch
      %52 = sbr.rel (0) target = $region29
    $region28: #{policy_act.1} parent=1 // pred_region
      %s54 = ssub.s32 640, 640
      %55 = vsyncadd [#allocation5], %s54
      %s56 = sshll.u32 [#allocation6], 4
      %s57 = int_to_ptr.vmem [resolvable:$true] %s56
      %62 = dma.hbm_to_vmem [thread:$0]  %s6, 640, %s57, [#allocation5], 128, 128, 8
    $region29: #{policy_act.1} parent=1 // pred_fallthru
      _
    // Predicated region
    $region30: #{policy_act.1} parent=1 // pred_check
      _
    $region31: #{policy_act.1} parent=1 // pred_check_branch
      %64 = sbr.rel (0) target = $region33
    $region32: #{policy_act.1} parent=1 // pred_region
      _
    $region33: #{policy_act.1} parent=1 // pred_fallthru
      _
    // Predicated region
    $region34: #{policy_act.1} parent=1 // pred_check
      _
    $region35: #{policy_act.1} parent=1 // pred_check_branch
      %66 = sbr.rel (0) target = $region37
    $region36: #{policy_act.1} parent=1 // pred_region
      %s68 = ssub.s32 16, 16
      %69 = vsyncadd [#allocation8], %s68
      %s71 = sshll.u32 [#allocation7], 4
      %s72 = int_to_ptr.vmem [resolvable:$true] %s71
      %74 = dma.hbm_to_vmem [thread:$0]  %s8, 16, %s72, [#allocation8]
    $region37: #{policy_act.1} parent=1 // pred_fallthru
      _
    // Predicated region
    $region38: #{policy_act.1} parent=1 // pred_check
      _
    $region39: #{policy_act.1} parent=1 // pred_check_branch
      %76 = sbr.rel (0) target = $region41
    $region40: #{policy_act.1} parent=1 // pred_region
      %77 = dma.done [#allocation3], 768
    $region41: #{policy_act.1} parent=1 // pred_fallthru
      _
    // Predicated region
    $region42: #{policy_act.1} parent=1 // pred_check
      _
    $region43: #{policy_act.1} parent=1 // pred_check_branch
      %79 = sbr.rel (0) target = $region45
    $region44: #{policy_act.1} parent=1 // pred_region
      %80 = dma.done [#allocation5], 1536
    $region45: #{policy_act.1} parent=1 // pred_fallthru
      _
    // Predicated region
    $region46: #{policy_act.1} parent=1 // pred_check
      _
    $region47: #{policy_act.1} parent=1 // pred_check_branch
      %82 = sbr.rel (0) target = $region49
    $region48: #{policy_act.1} parent=1 // pred_region
      %83 = dma.done [#allocation5], 640
    $region49: #{policy_act.1} parent=1 // pred_fallthru
      _
    // Predicated region
    $region50: #{policy_act.1} parent=1 // pred_check
      _
    $region51: #{policy_act.1} parent=1 // pred_check_branch
      %85 = sbr.rel (0) target = $region53
    $region52: #{policy_act.1} parent=1 // pred_region
      %86 = dma.done [#allocation8], 16
    $region53: #{policy_act.1} parent=1 // pred_fallthru
      _
    %v87 = vld [vmem:[%s0] sm:$0xff]
    %v88 = vld [vmem:[%s1] sm:$0xff]
    %v89 = vld [vmem:[#allocation2] sm:$0xff]
    %v90 = vld [vmem:[#allocation2 + $0x8] sm:$0xff]
    %v91 = vld [vmem:[#allocation2 + $0x10] sm:$0xff]
    %v92 = vld [vmem:[#allocation2 + $0x18] sm:$0xff]
    %v93 = vld [vmem:[#allocation2 + $0x20] sm:$0xff]
    %v94 = vld [vmem:[#allocation2 + $0x28] sm:$0xff]
    %v95 = vld [vmem:[%s4] sm:$0x7]
    %v97 = vlaneseq
    %v98 = vshrl.u32 %v97, 7
    %v99 = vsub.s32 0, %v98
    %v100 = vrot.slane %v95, %v99
    %v101 = vlaneseq
    %v102 = vshrl.u32 %v101, 7
    %v103 = vsub.s32 1, %v102
    %v104 = vrot.slane %v95, %v103
    %v105 = vlaneseq
    %v106 = vshrl.u32 %v105, 7
    %v107 = vsub.s32 2, %v106
    %v108 = vrot.slane %v95, %v107
    %vm112 = vcmask 130048
    %v114 = vsel %vm112, %v87, 0
    %116 = vmatprep.subr.mxu0 0.0
    %117 = vmatpush1.msra.mxu0 0.0
    %118 = vmatprep.subr.mxu0 0.0
    %119 = vmatpush1.msra.mxu0 0.0
    %120 = vmatprep.subr.mxu0 0.0
    %121 = vmatpush1.msra.mxu0 0.0
    %122 = vmatprep.subr.mxu0 0.0
    %123 = vmatpush1.msra.mxu0 0.0
    %124 = vmatprep.subr.mxu0 0.0
    %125 = vmatpush1.msra.mxu0 0.0
    %126 = vmatprep.subr.mxu0 0.0
    %127 = vmatpush1.msra.mxu0 0.0
    %128 = vmatprep.subr.mxu0 0.0
    %129 = vmatpush1.msra.mxu0 0.0
    %130 = vmatprep.subr.mxu0 0.0
    %131 = vmatpush1.msra.mxu0 0.0
    %132 = vmatprep.subr.mxu0 0.0
    %133 = vmatpush1.msra.mxu0 0.0
    %134 = vmatprep.subr.mxu0 0.0
    %135 = vmatpush1.msra.mxu0 0.0
    %136 = vmatprep.subr.mxu0 0.0
    %137 = vmatpush1.msra.mxu0 0.0
    %138 = vmatprep.subr.mxu0 0.0
    %139 = vmatpush1.msra.mxu0 0.0
    %140 = vmatprep.subr.mxu0 0.0
    %141 = vmatpush1.msra.mxu0 0.0
    %142 = vmatprep.subr.mxu0 0.0
    %143 = vmatpush1.msra.mxu0 0.0
    %144 = vmatprep.subr.mxu0 %v93
    %145 = vmatpush1.msra.mxu0 %v92
    %146 = vmatprep.subr.mxu0 %v90
    %147 = vmatpush1.msra.mxu0 %v89
    %148 = vmatprep.subr.mxu0 0.0
    %149 = vmatpush2.msra.mxu0 0.0
    %150 = vmatprep.subr.mxu0 0.0
    %151 = vmatpush2.msra.mxu0 0.0
    %152 = vmatprep.subr.mxu0 0.0
    %153 = vmatpush2.msra.mxu0 0.0
    %154 = vmatprep.subr.mxu0 0.0
    %155 = vmatpush2.msra.mxu0 0.0
    %156 = vmatprep.subr.mxu0 0.0
    %157 = vmatpush2.msra.mxu0 0.0
    %158 = vmatprep.subr.mxu0 0.0
    %159 = vmatpush2.msra.mxu0 0.0
    %160 = vmatprep.subr.mxu0 0.0
    %161 = vmatpush2.msra.mxu0 0.0
    %162 = vmatprep.subr.mxu0 0.0
    %163 = vmatpush2.msra.mxu0 0.0
    %164 = vmatprep.subr.mxu0 0.0
    %165 = vmatpush2.msra.mxu0 0.0
    %166 = vmatprep.subr.mxu0 0.0
    %167 = vmatpush2.msra.mxu0 0.0
    %168 = vmatprep.subr.mxu0 0.0
    %169 = vmatpush2.msra.mxu0 0.0
    %170 = vmatprep.subr.mxu0 0.0
    %171 = vmatpush2.msra.mxu0 0.0
    %172 = vmatprep.subr.mxu0 0.0
    %173 = vmatpush2.msra.mxu0 0.0
    %174 = vmatprep.subr.mxu0 0.0
    %175 = vmatpush2.msra.mxu0 0.0
    %176 = vmatprep.subr.mxu0 0.0
    %177 = vmatpush2.msra.mxu0 0.0
    %178 = vmatprep.subr.mxu0 0.0
    %179 = vmatpush2.msra.mxu0 0.0
    %180 = vmatprep.mubr.f32.mxu0 0.0
    %181 = vmatmul.mubr.f32.gmra.mxu0 %v114
    %v182 = vpop.f32.mrf.mxu0
    %v183 = vadd.f32 %v100, %v182
    %v184 = vpop.f32.mrf.mxu0
    %v185 = vadd.f32 %v104, %v184
    %186 = vdwg.mxu0
    %187 = vmatprep.subr.mxu0 0.0
    %188 = vmatpush1.msra.mxu0 0.0
    %189 = vmatprep.subr.mxu0 0.0
    %190 = vmatpush1.msra.mxu0 0.0
    %191 = vmatprep.subr.mxu0 0.0
    %192 = vmatpush1.msra.mxu0 0.0
    %193 = vmatprep.subr.mxu0 0.0
    %194 = vmatpush1.msra.mxu0 0.0
    %195 = vmatprep.subr.mxu0 0.0
    %196 = vmatpush1.msra.mxu0 0.0
    %197 = vmatprep.subr.mxu0 0.0
    %198 = vmatpush1.msra.mxu0 0.0
    %199 = vmatprep.subr.mxu0 0.0
    %200 = vmatpush1.msra.mxu0 0.0
    %201 = vmatprep.subr.mxu0 0.0
    %202 = vmatpush1.msra.mxu0 0.0
    %203 = vmatprep.subr.mxu0 0.0
    %204 = vmatpush1.msra.mxu0 0.0
    %205 = vmatprep.subr.mxu0 0.0
    %206 = vmatpush1.msra.mxu0 0.0
    %207 = vmatprep.subr.mxu0 0.0
    %208 = vmatpush1.msra.mxu0 0.0
    %209 = vmatprep.subr.mxu0 0.0
    %210 = vmatpush1.msra.mxu0 0.0
    %211 = vmatprep.subr.mxu0 0.0
    %212 = vmatpush1.msra.mxu0 0.0
    %213 = vmatprep.subr.mxu0 0.0
    %214 = vmatpush1.msra.mxu0 0.0
    %215 = vmatprep.subr.mxu0 0.0
    %216 = vmatpush1.msra.mxu0 %v94
    %217 = vmatprep.subr.mxu0 0.0
    %218 = vmatpush1.msra.mxu0 %v91
    %219 = vmatprep.subr.mxu0 0.0
    %220 = vmatpush2.msra.mxu0 0.0
    %221 = vmatprep.subr.mxu0 0.0
    %222 = vmatpush2.msra.mxu0 0.0
    %223 = vmatprep.subr.mxu0 0.0
    %224 = vmatpush2.msra.mxu0 0.0
    %225 = vmatprep.subr.mxu0 0.0
    %226 = vmatpush2.msra.mxu0 0.0
    %227 = vmatprep.subr.mxu0 0.0
    %228 = vmatpush2.msra.mxu0 0.0
    %229 = vmatprep.subr.mxu0 0.0
    %230 = vmatpush2.msra.mxu0 0.0
    %231 = vmatprep.subr.mxu0 0.0
    %232 = vmatpush2.msra.mxu0 0.0
    %233 = vmatprep.subr.mxu0 0.0
    %234 = vmatpush2.msra.mxu0 0.0
    %235 = vmatprep.subr.mxu0 0.0
    %236 = vmatpush2.msra.mxu0 0.0
    %237 = vmatprep.subr.mxu0 0.0
    %238 = vmatpush2.msra.mxu0 0.0
    %239 = vmatprep.subr.mxu0 0.0
    %240 = vmatpush2.msra.mxu0 0.0
    %241 = vmatprep.subr.mxu0 0.0
    %242 = vmatpush2.msra.mxu0 0.0
    %243 = vmatprep.subr.mxu0 0.0
    %244 = vmatpush2.msra.mxu0 0.0
    %245 = vmatprep.subr.mxu0 0.0
    %246 = vmatpush2.msra.mxu0 0.0
    %247 = vmatprep.subr.mxu0 0.0
    %248 = vmatpush2.msra.mxu0 0.0
    %249 = vmatprep.subr.mxu0 0.0
    %250 = vmatpush2.msra.mxu0 0.0
    %251 = vmatprep.mubr.f32.mxu0 0.0
    %252 = vmatmul.mubr.f32.gmra.mxu0 %v114
    %v253 = vpop.f32.mrf.mxu0
    %v254 = vadd.f32 %v108, %v253
    %v255 = vpop.f32.mrf.mxu0
    %256 = vdwg.mxu0
    %v257 = vld [vmem:[#allocation4] sm:$0xff]
    %v258 = vld [vmem:[#allocation4 + $0x8] sm:$0xff]
    %v259 = vld [vmem:[#allocation4 + $0x10] sm:$0xff]
    %v260 = vld [vmem:[#allocation4 + $0x18] sm:$0xff]
    %v261 = vld [vmem:[#allocation4 + $0x20] sm:$0xff]
    %v262 = vld [vmem:[#allocation4 + $0x28] sm:$0xff]
    %v263 = vld [vmem:[#allocation4 + $0x30] sm:$0xff]
    %v264 = vld [vmem:[#allocation4 + $0x38] sm:$0xff]
    %v265 = vld [vmem:[#allocation4 + $0x40] sm:$0xff]
    %v266 = vld [vmem:[#allocation4 + $0x48] sm:$0xff]
    %v267 = vld [vmem:[#allocation4 + $0x50] sm:$0xff]
    %v268 = vld [vmem:[#allocation4 + $0x58] sm:$0xff]
    %v269 = vld [vmem:[%s5] sm:$0x7]
    %v271 = vlaneseq
    %v272 = vshrl.u32 %v271, 7
    %v273 = vsub.s32 0, %v272
    %v274 = vrot.slane %v269, %v273
    %v275 = vlaneseq
    %v276 = vshrl.u32 %v275, 7
    %v277 = vsub.s32 1, %v276
    %v278 = vrot.slane %v269, %v277
    %v279 = vlaneseq
    %v280 = vshrl.u32 %v279, 7
    %v281 = vsub.s32 2, %v280
    %v282 = vrot.slane %v269, %v281
    %vm286 = vcmask 261120
    %v288 = vsel %vm286, %v88, 0
    %290 = vmatprep.subr.mxu0 0.0
    %291 = vmatpush1.msra.mxu0 0.0
    %292 = vmatprep.subr.mxu0 0.0
    %293 = vmatpush1.msra.mxu0 0.0
    %294 = vmatprep.subr.mxu0 0.0
    %295 = vmatpush1.msra.mxu0 0.0
    %296 = vmatprep.subr.mxu0 0.0
    %297 = vmatpush1.msra.mxu0 0.0
    %298 = vmatprep.subr.mxu0 0.0
    %299 = vmatpush1.msra.mxu0 0.0
    %300 = vmatprep.subr.mxu0 0.0
    %301 = vmatpush1.msra.mxu0 0.0
    %302 = vmatprep.subr.mxu0 0.0
    %303 = vmatpush1.msra.mxu0 0.0
    %304 = vmatprep.subr.mxu0 0.0
    %305 = vmatpush1.msra.mxu0 0.0
    %306 = vmatprep.subr.mxu0 0.0
    %307 = vmatpush1.msra.mxu0 0.0
    %308 = vmatprep.subr.mxu0 0.0
    %309 = vmatpush1.msra.mxu0 0.0
    %310 = vmatprep.subr.mxu0 0.0
    %311 = vmatpush1.msra.mxu0 0.0
    %312 = vmatprep.subr.mxu0 0.0
    %313 = vmatpush1.msra.mxu0 0.0
    %314 = vmatprep.subr.mxu0 %v267
    %315 = vmatpush1.msra.mxu0 %v266
    %316 = vmatprep.subr.mxu0 %v264
    %317 = vmatpush1.msra.mxu0 %v263
    %318 = vmatprep.subr.mxu0 %v261
    %319 = vmatpush1.msra.mxu0 %v260
    %320 = vmatprep.subr.mxu0 %v258
    %321 = vmatpush1.msra.mxu0 %v257
    %322 = vmatprep.subr.mxu0 0.0
    %323 = vmatpush2.msra.mxu0 0.0
    %324 = vmatprep.subr.mxu0 0.0
    %325 = vmatpush2.msra.mxu0 0.0
    %326 = vmatprep.subr.mxu0 0.0
    %327 = vmatpush2.msra.mxu0 0.0
    %328 = vmatprep.subr.mxu0 0.0
    %329 = vmatpush2.msra.mxu0 0.0
    %330 = vmatprep.subr.mxu0 0.0
    %331 = vmatpush2.msra.mxu0 0.0
    %332 = vmatprep.subr.mxu0 0.0
    %333 = vmatpush2.msra.mxu0 0.0
    %334 = vmatprep.subr.mxu0 0.0
    %335 = vmatpush2.msra.mxu0 0.0
    %336 = vmatprep.subr.mxu0 0.0
    %337 = vmatpush2.msra.mxu0 0.0
    %338 = vmatprep.subr.mxu0 0.0
    %339 = vmatpush2.msra.mxu0 0.0
    %340 = vmatprep.subr.mxu0 0.0
    %341 = vmatpush2.msra.mxu0 0.0
    %342 = vmatprep.subr.mxu0 0.0
    %343 = vmatpush2.msra.mxu0 0.0
    %344 = vmatprep.subr.mxu0 0.0
    %345 = vmatpush2.msra.mxu0 0.0
    %346 = vmatprep.subr.mxu0 0.0
    %347 = vmatpush2.msra.mxu0 0.0
    %348 = vmatprep.subr.mxu0 0.0
    %349 = vmatpush2.msra.mxu0 0.0
    %350 = vmatprep.subr.mxu0 0.0
    %351 = vmatpush2.msra.mxu0 0.0
    %352 = vmatprep.subr.mxu0 0.0
    %353 = vmatpush2.msra.mxu0 0.0
    %354 = vmatprep.mubr.f32.mxu0 0.0
    %355 = vmatmul.mubr.f32.gmra.mxu0 %v288
    %v356 = vpop.f32.mrf.mxu0
    %v357 = vadd.f32 %v274, %v356
    %v358 = vpop.f32.mrf.mxu0
    %v359 = vadd.f32 %v278, %v358
    %360 = vdwg.mxu0
    %361 = vmatprep.subr.mxu0 0.0
    %362 = vmatpush1.msra.mxu0 0.0
    %363 = vmatprep.subr.mxu0 0.0
    %364 = vmatpush1.msra.mxu0 0.0
    %365 = vmatprep.subr.mxu0 0.0
    %366 = vmatpush1.msra.mxu0 0.0
    %367 = vmatprep.subr.mxu0 0.0
    %368 = vmatpush1.msra.mxu0 0.0
    %369 = vmatprep.subr.mxu0 0.0
    %370 = vmatpush1.msra.mxu0 0.0
    %371 = vmatprep.subr.mxu0 0.0
    %372 = vmatpush1.msra.mxu0 0.0
    %373 = vmatprep.subr.mxu0 0.0
    %374 = vmatpush1.msra.mxu0 0.0
    %375 = vmatprep.subr.mxu0 0.0
    %376 = vmatpush1.msra.mxu0 0.0
    %377 = vmatprep.subr.mxu0 0.0
    %378 = vmatpush1.msra.mxu0 0.0
    %379 = vmatprep.subr.mxu0 0.0
    %380 = vmatpush1.msra.mxu0 0.0
    %381 = vmatprep.subr.mxu0 0.0
    %382 = vmatpush1.msra.mxu0 0.0
    %383 = vmatprep.subr.mxu0 0.0
    %384 = vmatpush1.msra.mxu0 0.0
    %385 = vmatprep.subr.mxu0 0.0
    %386 = vmatpush1.msra.mxu0 %v268
    %387 = vmatprep.subr.mxu0 0.0
    %388 = vmatpush1.msra.mxu0 %v265
    %389 = vmatprep.subr.mxu0 0.0
    %390 = vmatpush1.msra.mxu0 %v262
    %391 = vmatprep.subr.mxu0 0.0
    %392 = vmatpush1.msra.mxu0 %v259
    %393 = vmatprep.subr.mxu0 0.0
    %394 = vmatpush2.msra.mxu0 0.0
    %395 = vmatprep.subr.mxu0 0.0
    %396 = vmatpush2.msra.mxu0 0.0
    %397 = vmatprep.subr.mxu0 0.0
    %398 = vmatpush2.msra.mxu0 0.0
    %399 = vmatprep.subr.mxu0 0.0
    %400 = vmatpush2.msra.mxu0 0.0
    %401 = vmatprep.subr.mxu0 0.0
    %402 = vmatpush2.msra.mxu0 0.0
    %403 = vmatprep.subr.mxu0 0.0
    %404 = vmatpush2.msra.mxu0 0.0
    %405 = vmatprep.subr.mxu0 0.0
    %406 = vmatpush2.msra.mxu0 0.0
    %407 = vmatprep.subr.mxu0 0.0
    %408 = vmatpush2.msra.mxu0 0.0
    %409 = vmatprep.subr.mxu0 0.0
    %410 = vmatpush2.msra.mxu0 0.0
    %411 = vmatprep.subr.mxu0 0.0
    %412 = vmatpush2.msra.mxu0 0.0
    %413 = vmatprep.subr.mxu0 0.0
    %414 = vmatpush2.msra.mxu0 0.0
    %415 = vmatprep.subr.mxu0 0.0
    %416 = vmatpush2.msra.mxu0 0.0
    %417 = vmatprep.subr.mxu0 0.0
    %418 = vmatpush2.msra.mxu0 0.0
    %419 = vmatprep.subr.mxu0 0.0
    %420 = vmatpush2.msra.mxu0 0.0
    %421 = vmatprep.subr.mxu0 0.0
    %422 = vmatpush2.msra.mxu0 0.0
    %423 = vmatprep.subr.mxu0 0.0
    %424 = vmatpush2.msra.mxu0 0.0
    %425 = vmatprep.mubr.f32.mxu0 0.0
    %426 = vmatmul.mubr.f32.gmra.mxu0 %v288
    %v427 = vpop.f32.mrf.mxu0
    %v428 = vadd.f32 %v282, %v427
    %v429 = vpop.f32.mrf.mxu0
    %430 = vdwg.mxu0
    %v431 = vadd.f32 %v183, %v357
    %v432 = vxor.u32 %v431, 2147483648
    %v433 = vmul.f32 %v432, 1.442695
    %v434 = vpow.pop %v433
    %v435 = vadd.f32 %v434, 1.0
    %v436 = vrcp.pop %v435
    %v437 = vmul.f32 1.0, %v436
    %v438 = vadd.f32 %v185, %v359
    %v439 = vxor.u32 %v438, 2147483648
    %v440 = vmul.f32 %v439, 1.442695
    %v441 = vpow.pop %v440
    %v442 = vadd.f32 %v441, 1.0
    %v443 = vrcp.pop %v442
    %v444 = vmul.f32 1.0, %v443
    %v445 = vmul.f32 %v437, %v428
    %v446 = vadd.f32 %v254, %v445
    %v447 = vtanh.pop %v446
    %v448 = vsub.f32 1.0, %v444
    %v449 = vmul.f32 %v448, %v447
    %v450 = vmul.f32 %v444, %v88
    %v451 = vadd.f32 %v449, %v450
    %452 = vst.msk [vmem:[%s9] sm:$0xff] %vm286, %v451
    %v453 = vlaneseq
    %v454 = vand.u32 %v453, 127
    %v455 = vld [vmem:[%s7] sm:$0x1]
    %v456 = vld [vmem:[#allocation6] sm:$0xff]
    %v457 = vmul.f32 %v451, %v456
    %v458 = vsel %vm286, %v457, 0.0
    %459 = vadd.xlane.f32.xlu0 %v458
    %v460 = vpop.xlane.xlu0 %459
    %v461 = vrot.slane %v460, 4
    %v462 = vadd.f32 %v460, %v461
    %v463 = vrot.slane %v462, 2
    %v464 = vadd.f32 %v462, %v463
    %v465 = vrot.slane %v464, 1
    %v466 = vadd.f32 %v464, %v465
    %vm467 = vcmp.eq.s32.totalorder %v454, 0
    %v468 = vsel %vm467, %v466, 0.0
    %v469 = vadd.f32 %v455, %v468
    %s470 = scalar_lea.vmem [#allocation6], 8
    %v471 = vld [vmem:[%s470] sm:$0xff]
    %v472 = vmul.f32 %v451, %v471
    %v473 = vsel %vm286, %v472, 0.0
    %474 = vadd.xlane.f32.xlu0 %v473
    %v475 = vpop.xlane.xlu0 %474
    %v476 = vrot.slane %v475, 4
    %v477 = vadd.f32 %v475, %v476
    %v478 = vrot.slane %v477, 2
    %v479 = vadd.f32 %v477, %v478
    %v480 = vrot.slane %v479, 1
    %v481 = vadd.f32 %v479, %v480
    %vm482 = vcmp.eq.s32.totalorder %v454, 1
    %v483 = vsel %vm482, %v481, 0.0
    %v484 = vadd.f32 %v469, %v483
    %s485 = scalar_lea.vmem [#allocation6], 16
    %v486 = vld [vmem:[%s485] sm:$0xff]
    %v487 = vmul.f32 %v451, %v486
    %v488 = vsel %vm286, %v487, 0.0
    %489 = vadd.xlane.f32.xlu0 %v488
    %v490 = vpop.xlane.xlu0 %489
    %v491 = vrot.slane %v490, 4
    %v492 = vadd.f32 %v490, %v491
    %v493 = vrot.slane %v492, 2
    %v494 = vadd.f32 %v492, %v493
    %v495 = vrot.slane %v494, 1
    %v496 = vadd.f32 %v494, %v495
    %vm497 = vcmp.eq.s32.totalorder %v454, 2
    %v498 = vsel %vm497, %v496, 0.0
    %v499 = vadd.f32 %v484, %v498
    %s500 = scalar_lea.vmem [#allocation6], 24
    %v501 = vld [vmem:[%s500] sm:$0xff]
    %v502 = vmul.f32 %v451, %v501
    %v503 = vsel %vm286, %v502, 0.0
    %504 = vadd.xlane.f32.xlu0 %v503
    %v505 = vpop.xlane.xlu0 %504
    %v506 = vrot.slane %v505, 4
    %v507 = vadd.f32 %v505, %v506
    %v508 = vrot.slane %v507, 2
    %v509 = vadd.f32 %v507, %v508
    %v510 = vrot.slane %v509, 1
    %v511 = vadd.f32 %v509, %v510
    %vm512 = vcmp.eq.s32.totalorder %v454, 3
    %v513 = vsel %vm512, %v511, 0.0
    %v514 = vadd.f32 %v499, %v513
    %s515 = scalar_lea.vmem [#allocation6], 32
    %v516 = vld [vmem:[%s515] sm:$0xff]
    %v517 = vmul.f32 %v451, %v516
    %v518 = vsel %vm286, %v517, 0.0
    %519 = vadd.xlane.f32.xlu0 %v518
    %v520 = vpop.xlane.xlu0 %519
    %v521 = vrot.slane %v520, 4
    %v522 = vadd.f32 %v520, %v521
    %v523 = vrot.slane %v522, 2
    %v524 = vadd.f32 %v522, %v523
    %v525 = vrot.slane %v524, 1
    %v526 = vadd.f32 %v524, %v525
    %vm527 = vcmp.eq.s32.totalorder %v454, 4
    %v528 = vsel %vm527, %v526, 0.0
    %v529 = vadd.f32 %v514, %v528
    %v530 = vxor.u32 %v529, 2147483648
    %v531 = vmul.f32 %v530, 1.442695
    %v532 = vpow.pop %v531
    %v533 = vadd.f32 %v532, 1.0
    %v534 = vrcp.pop %v533
    %v535 = vmul.f32 1.0, %v534
    %v536 = vadd.f32 %v535, 0.0
    %v537 = vld [vmem:[#allocation7] sm:$0x1]
    %v538 = vmax.f32 %v537, 0.0
    %vm539 = vcmp.ne.f32.partialorder %v537, %v537
    %v540 = vadd.f32 %v537, 0.0
    %v541 = vand.u32 2147483647, %v537
    %v542 = vsub.f32 0.0, %v541
    %v543 = vmul.f32 %v542, 1.442695
    %v544 = vpow.pop %v543
    %v545 = vadd.f32 %v544, 1.0
    %v546 = vlog2.pop %v545
    %v547 = vmul.f32 %v546, 0.6931472
    %v548 = vmul.f32 -0.5, %v544
    %v549 = vadd.f32 %v548, 1.0
    %v550 = vmul.f32 %v549, %v544
    %v551 = vand.u32 2147483647, %v544
    %vm552 = vcmp.lt.f32.partialorder %v551, 0.0004427343
    %v553 = vsel %vm552, %v550, %v547
    %v554 = vadd.f32 %v538, %v553
    %v555 = vsel %vm539, %v540, %v554
    %v556 = vadd.f32 %v555, 0.001
    %v557 = vlog2.pop %v556
    %v558 = vmul.f32 %v557, 0.6931472
    %vm559 = vcmask 24576
    %v560 = vsel %vm559, %v558, 0.0
    %561 = vadd.xlane.f32.xlu0 %v560
    %v562 = vpop.xlane.xlu0 %561
    %v563 = vsub.f32 0.0, %v562
    %v564 = vsub.f32 %v563, 3.675754
    %vm565 = vcmp.ge.s32.totalorder %v454, 1
    %vm566 = vcmp.le.s32.totalorder %v454, 4
    %vm567 = vmand %vm565, %vm566
    %v568 = vsel %vm567, %v536, 0.0
    %v569 = vsel %vm467, %v529, %v568
    %vm570 = vcmp.eq.s32.totalorder %v454, 5
    %v571 = vsel %vm570, %v564, %v569
    %572 = vst [vmem:[%s10] sm:$0x1] %v571
    // Predicated region
    $region54: #{policy_act.1} parent=1 // pred_check
      _
    $region55: #{policy_act.1} parent=1 // pred_check_branch
      %574 = sbr.rel (0) target = $region57
    $region56: #{policy_act.1} parent=1 // pred_region
      _
    $region57: #{policy_act.1} parent=1 // pred_fallthru
      _
    // Predicated region
    $region58: #{policy_act.1} parent=1 // pred_check
      _
    $region59: #{policy_act.1} parent=1 // pred_check_branch
      %576 = sbr.rel (0) target = $region61
    $region60: #{policy_act.1} parent=1 // pred_region
      _
    $region61: #{policy_act.1} parent=1 // pred_fallthru
      _
    // Predicated region
    $region62: #{policy_act.1} parent=1 // pred_check
      _
    $region63: #{policy_act.1} parent=1 // pred_check_branch
      %578 = sbr.rel (0) target = $region65
    $region64: #{policy_act.1} parent=1 // pred_region
      _
    $region65: #{policy_act.1} parent=1 // pred_fallthru
      _
    // Predicated region
    $region66: #{policy_act.1} parent=1 // pred_check
      _
    $region67: #{policy_act.1} parent=1 // pred_check_branch
      %580 = sbr.rel (0) target = $region69
    $region68: #{policy_act.1} parent=1 // pred_region
      _
    $region69: #{policy_act.1} parent=1 // pred_fallthru
      _
    %581 = vsyncpa [#allocation3], 1
    %582 = vsyncpa [#allocation5], 1
    %583 = vsyncpa [#allocation8], 1

</llo_original>
